<compile_context>
chip_gen: v6e
topology: v6e:2x2x1
jax: 0.10.0
libtpu: 0.0.40
codegen_flags: <defaults>
</compile_context>

<pallas_src>
import functools

import jax
import jax.numpy as jnp
from jax import lax
from jax.experimental import pallas as pl
from jax.experimental.pallas import tpu as pltpu


def _round_up(x, m):
    return ((x + m - 1) // m) * m


# -----------------------------------------------------------------------------
# Gram-matrix kernel (used at module init for the targets).
# G = (x @ x.T) * (0.25 / (B*H*W*F));   K-gridded, output tile is the accumulator.
# -----------------------------------------------------------------------------
def _gram_kernel(x_ref, g_ref, *, scale, use_bf16_mxu):
    k = pl.program_id(0)

    @pl.when(k == 0)
    def _():
        g_ref[...] = jnp.zeros_like(g_ref)

    f = x_ref[...]
    if use_bf16_mxu:
        f = f.astype(jnp.bfloat16)
    g_ref[...] += lax.dot_general(f, f, (((1,), (1,)), ((), ())),
                                  preferred_element_type=jnp.float32)

    @pl.when(k == pl.num_programs(0) - 1)
    def _():
        g_ref[...] = g_ref[...] * scale          # 0.5 pre-scale folded in here


def gram_matrix(x_bhwf, *, use_bf16_mxu=False, tk=512):
    """Pallas equivalent of the PyTorch gram_matrix(): (B,H,W,F) -> (B*H, B*H)."""
    b, h, w, f = x_bhwf.shape
    m, kdim = b * h, w * f
    m_pad = _round_up(max(m, 8), 128)            # lane/MXU-aligned gram
    k_pad = _round_up(max(kdim, 128), 128)
    tk = min(tk, k_pad)

    feats = x_bhwf.reshape(m, kdim).astype(jnp.float32)
    feats = jnp.pad(feats, ((0, m_pad - m), (0, k_pad - kdim)))

    scale = 0.25 / float(b * h * w * f)          # ORIGINAL sizes, not padded

    cost = pl.CostEstimate(
        flops=2 * m_pad * m_pad * k_pad + m_pad * m_pad,
        transcendentals=0,
        bytes_accessed=4 * (m_pad * k_pad + m_pad * m_pad))

    g_pad = pl.pallas_call(
        functools.partial(_gram_kernel, scale=scale, use_bf16_mxu=use_bf16_mxu),
        out_shape=jax.ShapeDtypeStruct((m_pad, m_pad), jnp.float32),
        grid_spec=pltpu.PrefetchScalarGridSpec(
            num_scalar_prefetch=0,
            grid=(k_pad // tk,),
            in_specs=[pl.BlockSpec((m_pad, tk), lambda kk: (0, kk))],
            out_specs=pl.BlockSpec((m_pad, m_pad), lambda kk: (0, 0)),
        ),
        compiler_params=pltpu.CompilerParams(
            dimension_semantics=("arbitrary",),
            vmem_limit_bytes=48 << 20),
        cost_estimate=cost,
    )(feats)
    return g_pad[:m, :m]


# -----------------------------------------------------------------------------
# Fused forward kernel: gram of the input (VMEM scratch only) + collapsed
# weighted-MSE reduction against the precomputed weighted target T_w.
#   loss = sw*mean(G^2) - 2*mean(G*T_w) + c
# -----------------------------------------------------------------------------
def _style_loss_kernel(consts_ref, x_ref, tw_ref, loss_ref, acc_ref, *,
                       gram_scale, inv_mm, use_bf16_mxu):
    k = pl.program_id(0)

    @pl.when(k == 0)
    def _():
        acc_ref[...] = jnp.zeros_like(acc_ref)

    f = x_ref[...]
    if use_bf16_mxu:
        f = f.astype(jnp.bfloat16)
    acc_ref[...] += lax.dot_general(f, f, (((1,), (1,)), ((), ())),
                                    preferred_element_type=jnp.float32)

    @pl.when(k == pl.num_programs(0) - 1)
    def _():
        g = acc_ref[...] * gram_scale            # padded rows/cols are exactly 0
        sw = consts_ref[0]
        c = consts_ref[1]
        gg = jnp.sum(g * g)                      # zeros in the pad contribute 0
        gt = jnp.sum(g * tw_ref[...])
        loss_ref[0, 0] = (sw * gg - 2.0 * gt) * inv_mm + c


class StyleLossAll:
    """JAX/Pallas port of the PyTorch StyleLossAll module (forward pass)."""

    def __init__(self, target_feature, style_weights, *, use_bf16_mxu=False, tk=512):
        self.use_bf16_mxu = use_bf16_mxu
        self.tk = tk
        self.style_weights = [float(wi) for wi in style_weights]

        # Same as PyTorch: targets are gram matrices of the target features.
        self.targets = [gram_matrix(t, use_bf16_mxu=use_bf16_mxu, tk=tk)
                        for t in target_feature]

        # Hoisted target precompute (done ONCE, not per forward call):
        #   T_w = sum_i w_i*T_i, c = sum_i w_i*mean(T_i^2), sw = sum_i w_i.
        w_arr = jnp.asarray(self.style_weights, dtype=jnp.float32)
        t_stack = jnp.stack(self.targets).astype(jnp.float32)        # (N, M, M)
        sw = jnp.sum(w_arr)
        c = jnp.sum(w_arr * jnp.mean(t_stack * t_stack, axis=(1, 2)))
        t_w = jnp.einsum("n,nij->ij", w_arr, t_stack)                 # (M, M)

        self._m = t_stack.shape[1]
        self._m_pad = _round_up(max(self._m, 8), 128)
        pad = self._m_pad - self._m
        self._t_w_pad = jnp.pad(t_w, ((0, pad), (0, pad)))            # zero pad
        self._consts = jnp.stack([sw, c]).astype(jnp.float32)         # (2,) SMEM

        self.loss = jnp.float32(0.0)    # mirrors F.mse_loss(T0, T0) == 0

    def forward(self, x_bhwf):
        b, h, w, f = x_bhwf.shape
        m, kdim = b * h, w * f
        assert m == self._m, "input gram size must match target gram size"
        m_pad = self._m_pad
        k_pad = _round_up(max(kdim, 128), 128)
        tk = min(self.tk, k_pad)

        feats = x_bhwf.reshape(m, kdim).astype(jnp.float32)
        feats = jnp.pad(feats, ((0, m_pad - m), (0, k_pad - kdim)))

        gram_scale = 0.25 / float(b * h * w * f)   # ORIGINAL sizes (0.5 folded in)
        inv_mm = 1.0 / float(m * m)                # MSE mean over ORIGINAL (M, M)

        cost = pl.CostEstimate(
            flops=2 * m_pad * m_pad * k_pad + 4 * m_pad * m_pad,
            transcendentals=0,
            bytes_accessed=4 * (m_pad * k_pad + m_pad * m_pad) + 12)

        loss = pl.pallas_call(
            functools.partial(_style_loss_kernel,
                              gram_scale=gram_scale, inv_mm=inv_mm,
                              use_bf16_mxu=self.use_bf16_mxu),
            out_shape=jax.ShapeDtypeStruct((1, 1), jnp.float32),
            grid_spec=pltpu.PrefetchScalarGridSpec(
                num_scalar_prefetch=1,                       # consts -> SMEM
                grid=(k_pad // tk,),
                in_specs=[pl.BlockSpec((m_pad, tk), lambda kk, consts: (0, kk)),
                          pl.BlockSpec((m_pad, m_pad), lambda kk, consts: (0, 0))],
                out_specs=pl.BlockSpec((1, 1), lambda kk, consts: (0, 0),
                                       memory_space=pltpu.MemorySpace.SMEM),
                scratch_shapes=[pltpu.VMEM((m_pad, m_pad), jnp.float32)],
            ),
            compiler_params=pltpu.CompilerParams(
                dimension_semantics=("arbitrary",),
                vmem_limit_bytes=48 << 20),
            cost_estimate=cost,
        )(self._consts, feats, self._t_w_pad)

        self.loss = loss[0, 0]
        return x_bhwf                               # module returns its input


if __name__ == "__main__":
    key = jax.random.PRNGKey(0)
    B, H, W, F = 2, 16, 16, 4                       # (batch, h, w, f_map_num)
    N_TARGETS = 3
    k_in, *k_tgt = jax.random.split(key, N_TARGETS + 1)

    x = jax.random.normal(k_in, (B, H, W, F), dtype=jnp.float32)
    target_feature = [jax.random.normal(kk, (B, H, W, F), dtype=jnp.float32)
                      for kk in k_tgt]
    style_weights = [0.5, 1.0, 2.0]

    # pure-JAX f32 reference
    def ref_gram(t):
        b, h, w, f = t.shape
        feats = (t / 2.0).reshape(b * h, w * f)
        g = jnp.matmul(feats, feats.T, precision=lax.Precision.HIGHEST)
        return g / (b * h * w * f)

    ref_targets = [ref_gram(t) for t in target_feature]
    g_ref = ref_gram(x)
    ref_loss = sum(jnp.mean((g_ref - ti) ** 2) * wi
                   for ti, wi in zip(ref_targets, style_weights))

    # f32 path (default)
    module = StyleLossAll(target_feature, style_weights)
    out = module.forward(x)
    jax.block_until_ready((out, module.loss))

    assert jnp.array_equal(out, x), "forward must return its input unchanged"
    for ti, ri in zip(module.targets, ref_targets):
        assert jnp.allclose(ti, ri, rtol=1e-3, atol=1e-6), "target gram mismatch"
    assert jnp.allclose(module.loss, ref_loss, rtol=5e-3, atol=1e-7), (
        module.loss, ref_loss)

    # bf16-MXU fast path (v6e/v7x) — slightly different numerics, relaxed check.
    module_bf16 = StyleLossAll(target_feature, style_weights, use_bf16_mxu=True)
    out_bf16 = module_bf16.forward(x)
    jax.block_until_ready((out_bf16, module_bf16.loss))
    assert jnp.allclose(module_bf16.loss, ref_loss, rtol=1e-1, atol=1e-7), (
        module_bf16.loss, ref_loss)

    print("KERNEL_OK")
</pallas_src>

<mosaic_0001>
module attributes {stable_mosaic.version = 11 : i64} {
  func.func @_gram_kernel(%arg0: i32, %arg1: memref<128x128xf32, #tpu.memory_space<vmem>>, %arg2: memref<128x128xf32, #tpu.memory_space<vmem>>) attributes {dimension_semantics = [#tpu.dimension_semantics<arbitrary>], iteration_bounds = array<i64: 1>, scalar_prefetch = 0 : i64, scratch_operands = 0 : i64, tpu.core_type = #tpu.core_type<tc>, window_params = [{transform_indices = @transform_0, window_bounds = array<i64: 128, 128>}, {pipeline_mode = #tpu.pipeline_mode<synchronous>, transform_indices = @transform_1, window_bounds = array<i64: 128, 128>}]} {
    %c0_i32 = arith.constant 0 : i32
    %0 = arith.cmpi eq, %arg0, %c0_i32 : i32
    %1 = arith.extui %0 : i1 to i32
    %c0_i32_0 = arith.constant 0 : i32
    %2 = arith.cmpi ne, %1, %c0_i32_0 : i32
    scf.if %2 {
      %cst_8 = arith.constant 0.000000e+00 : f32
      %11 = vector.broadcast %cst_8 : f32 to vector<128x128xf32>
      %c0_9 = arith.constant 0 : index
      %c0_10 = arith.constant 0 : index
      %12 = vector.load %arg2[%c0_9, %c0_10] : memref<128x128xf32, #tpu.memory_space<vmem>>, vector<128x128xf32>
      tpu.vector_store %arg2[%c0_9, %c0_10], %11 {strides = array<i32>} : memref<128x128xf32, #tpu.memory_space<vmem>>, vector<128x128xf32>,
    } else {
    }
    %c0 = arith.constant 0 : index
    %c0_1 = arith.constant 0 : index
    %3 = vector.load %arg1[%c0, %c0_1] : memref<128x128xf32, #tpu.memory_space<vmem>>, vector<128x128xf32>
    %c0_2 = arith.constant 0 : index
    %c0_3 = arith.constant 0 : index
    %4 = vector.load %arg2[%c0_2, %c0_3] : memref<128x128xf32, #tpu.memory_space<vmem>>, vector<128x128xf32>
    %cst = arith.constant dense<0.000000e+00> : vector<128x128xf32>
    %5 = tpu.matmul %3, %3, %cst {dimension_numbers = #tpu.dot_dimension_numbers<[1], [1], [0], [0], [0, 0, 1, 0], [], []>} : vector<128x128xf32>, vector<128x128xf32>, vector<128x128xf32> -> vector<128x128xf32>
    %6 = arith.addf %4, %5 : vector<128x128xf32>
    %c0_4 = arith.constant 0 : index
    %c0_5 = arith.constant 0 : index
    %7 = vector.load %arg2[%c0_4, %c0_5] : memref<128x128xf32, #tpu.memory_space<vmem>>, vector<128x128xf32>
    tpu.vector_store %arg2[%c0_4, %c0_5], %6 {strides = array<i32>} : memref<128x128xf32, #tpu.memory_space<vmem>>, vector<128x128xf32>,
    %c0_i32_6 = arith.constant 0 : i32
    %8 = arith.cmpi eq, %arg0, %c0_i32_6 : i32
    %9 = arith.extui %8 : i1 to i32
    %c0_i32_7 = arith.constant 0 : i32
    %10 = arith.cmpi ne, %9, %c0_i32_7 : i32
    scf.if %10 {
      %c0_8 = arith.constant 0 : index
      %c0_9 = arith.constant 0 : index
      %11 = vector.load %arg2[%c0_8, %c0_9] : memref<128x128xf32, #tpu.memory_space<vmem>>, vector<128x128xf32>
      %cst_10 = arith.constant 1.22070313E-4 : f32
      %12 = vector.broadcast %cst_10 : f32 to vector<128x128xf32>
      %13 = arith.mulf %11, %12 : vector<128x128xf32>
      %c0_11 = arith.constant 0 : index
      %c0_12 = arith.constant 0 : index
      %14 = vector.load %arg2[%c0_11, %c0_12] : memref<128x128xf32, #tpu.memory_space<vmem>>, vector<128x128xf32>
      tpu.vector_store %arg2[%c0_11, %c0_12], %13 {strides = array<i32>} : memref<128x128xf32, #tpu.memory_space<vmem>>, vector<128x128xf32>,
    } else {
    }
    return
  }
  func.func @transform_0(%arg0: i32) -> (i32, i32) {
    %c0_i32 = arith.constant 0 : i32
    %c0_i32_0 = arith.constant 0 : i32
    return %c0_i32, %arg0 : i32, i32
  }
  func.func @transform_1(%arg0: i32) -> (i32, i32) {
    %c0_i32 = arith.constant 0 : i32
    %c0_i32_0 = arith.constant 0 : i32
    %c0_i32_1 = arith.constant 0 : i32
    return %c0_i32, %c0_i32_0 : i32, i32
  }
}

</mosaic_0001>

<llo_original>
// kernel: tpu_custom_call.1
$region0: #{tpu_custom_call.1}
  #allocation0 [shape = 'u32[]', space=smem, size = 0x4, offset = 0x4, fixed_abs, tag = 'smem constant byte address 0x4 - core index']
  #allocation1 [shape = 'u32[144,128]{1,0:T(1,128)}', space=vmem, size = 0x12000, scoped, tag = 'internal scratch']
  %s0 = inlined_call_operand.hbm [shape: f32[128,128], index: 0, kind: input, shape index: {}]
  %s1 = inlined_call_operand.hbm [shape: f32[128,128], index: 1, kind: output, shape index: {}]
  %s2 = sld [smem:[#allocation0]]
  $region26: #{tpu_custom_call.1} parent=0
    _
  %s4 = ssub.s32 1, %s2
  %s5 = scalar_select 0, %s4, %s2
  $region1: #{tpu_custom_call.1} parent=0
    #allocation2 [shape = 'u8[65536]{0}', space=vmem, size = 0x10000, scoped, tag = 'input window, operand 0, single buffered']
    #allocation3 [shape = 's32[1]{0}', space=sflag, size = 0x4, scoped, tag = 'scoped memory for tpu_custom_call.1']
    #allocation4 [shape = 's32[1]{0}', space=sflag, size = 0x4, scoped, tag = 'scoped memory for tpu_custom_call.1']
    #allocation5 [shape = 'u8[65536]{0}', space=vmem, size = 0x10000, scoped, tag = 'output window, operand 0, single buffered']
    %6 = vsyncpa [#allocation3], 0
    %7 = vsyncpa [#allocation4], 0
    // Predicated region
    $region2: #{tpu_custom_call.1} parent=1 // pred_check
      _
    $region3: #{tpu_custom_call.1} parent=1 // pred_check_branch
      %9 = sbr.rel (0) target = $region5
    $region4: #{tpu_custom_call.1} parent=1 // pred_region
      %s11 = ssub.s32 2048, 2048
      %12 = vsyncadd [#allocation3], %s11
      %s13 = sshll.u32 [#allocation2], 4
      %s14 = int_to_ptr.vmem [resolvable:$true] %s13
      %19 = dma.hbm_to_vmem [thread:$0]  %s0, 2048, %s14, [#allocation3], 128, 128, 8
    $region5: #{tpu_custom_call.1} parent=1 // pred_fallthru
      _
    // Predicated region
    $region6: #{tpu_custom_call.1} parent=1 // pred_check
      _
    $region7: #{tpu_custom_call.1} parent=1 // pred_check_branch
      %21 = sbr.rel (0) target = $region9
    $region8: #{tpu_custom_call.1} parent=1 // pred_region
      %22 = dma.done [#allocation3], 2048
    $region9: #{tpu_custom_call.1} parent=1 // pred_fallthru
      _
    %p23 = scmp.eq.s32.totalorder 0, 0
    // Predicated region
    $region10: #{tpu_custom_call.1} parent=1 // pred_check
      %p24 = pneg %p23
    $region11: #{tpu_custom_call.1} parent=1 // pred_check_branch
      %26 = sbr.rel (%p24) target = $region13
    $region12: #{tpu_custom_call.1} parent=1 // pred_region
      %27 = vst [vmem:[#allocation5] sm:$0xff] 0.0
      %28 = vst [vmem:[#allocation5 + $0x8] sm:$0xff] 0.0
      %29 = vst [vmem:[#allocation5 + $0x10] sm:$0xff] 0.0
      %30 = vst [vmem:[#allocation5 + $0x18] sm:$0xff] 0.0
      %31 = vst [vmem:[#allocation5 + $0x20] sm:$0xff] 0.0
      %32 = vst [vmem:[#allocation5 + $0x28] sm:$0xff] 0.0
      %33 = vst [vmem:[#allocation5 + $0x30] sm:$0xff] 0.0
      %34 = vst [vmem:[#allocation5 + $0x38] sm:$0xff] 0.0
      %35 = vst [vmem:[#allocation5 + $0x40] sm:$0xff] 0.0
      %36 = vst [vmem:[#allocation5 + $0x48] sm:$0xff] 0.0
      %37 = vst [vmem:[#allocation5 + $0x50] sm:$0xff] 0.0
      %38 = vst [vmem:[#allocation5 + $0x58] sm:$0xff] 0.0
      %39 = vst [vmem:[#allocation5 + $0x60] sm:$0xff] 0.0
      %40 = vst [vmem:[#allocation5 + $0x68] sm:$0xff] 0.0
      %41 = vst [vmem:[#allocation5 + $0x70] sm:$0xff] 0.0
      %42 = vst [vmem:[#allocation5 + $0x78] sm:$0xff] 0.0
    $region13: #{tpu_custom_call.1} parent=1 // pred_fallthru
      _
    %v43 = vld [vmem:[#allocation2] sm:$0xff]
    %v44 = vld [vmem:[#allocation2 + $0x8] sm:$0xff]
    %v45 = vld [vmem:[#allocation2 + $0x10] sm:$0xff]
    %v46 = vld [vmem:[#allocation2 + $0x18] sm:$0xff]
    %v47 = vld [vmem:[#allocation2 + $0x20] sm:$0xff]
    %v48 = vld [vmem:[#allocation2 + $0x28] sm:$0xff]
    %v49 = vld [vmem:[#allocation2 + $0x30] sm:$0xff]
    %v50 = vld [vmem:[#allocation2 + $0x38] sm:$0xff]
    %v51 = vld [vmem:[#allocation2 + $0x40] sm:$0xff]
    %v52 = vld [vmem:[#allocation2 + $0x48] sm:$0xff]
    %v53 = vld [vmem:[#allocation2 + $0x50] sm:$0xff]
    %v54 = vld [vmem:[#allocation2 + $0x58] sm:$0xff]
    %v55 = vld [vmem:[#allocation2 + $0x60] sm:$0xff]
    %v56 = vld [vmem:[#allocation2 + $0x68] sm:$0xff]
    %v57 = vld [vmem:[#allocation2 + $0x70] sm:$0xff]
    %v58 = vld [vmem:[#allocation2 + $0x78] sm:$0xff]
    %v59 = vld [vmem:[#allocation5] sm:$0xff]
    %v60 = vld [vmem:[#allocation5 + $0x8] sm:$0xff]
    %v61 = vld [vmem:[#allocation5 + $0x10] sm:$0xff]
    %v62 = vld [vmem:[#allocation5 + $0x18] sm:$0xff]
    %v63 = vld [vmem:[#allocation5 + $0x20] sm:$0xff]
    %v64 = vld [vmem:[#allocation5 + $0x28] sm:$0xff]
    %v65 = vld [vmem:[#allocation5 + $0x30] sm:$0xff]
    %v66 = vld [vmem:[#allocation5 + $0x38] sm:$0xff]
    %v67 = vld [vmem:[#allocation5 + $0x40] sm:$0xff]
    %v68 = vld [vmem:[#allocation5 + $0x48] sm:$0xff]
    %v69 = vld [vmem:[#allocation5 + $0x50] sm:$0xff]
    %v70 = vld [vmem:[#allocation5 + $0x58] sm:$0xff]
    %v71 = vld [vmem:[#allocation5 + $0x60] sm:$0xff]
    %v72 = vld [vmem:[#allocation5 + $0x68] sm:$0xff]
    %v73 = vld [vmem:[#allocation5 + $0x70] sm:$0xff]
    %v74 = vld [vmem:[#allocation5 + $0x78] sm:$0xff]
    %75 = vmatprep.subr.mxu0 0.0
    %76 = vmatpush1.xpose.msra.mxu0 %v58
    %77 = vmatprep.subr.mxu0 0.0
    %78 = vmatpush1.xpose.msra.mxu0 %v57
    %79 = vmatprep.subr.mxu0 0.0
    %80 = vmatpush1.xpose.msra.mxu0 %v56
    %81 = vmatprep.subr.mxu0 0.0
    %82 = vmatpush1.xpose.msra.mxu0 %v55
    %83 = vmatprep.subr.mxu0 0.0
    %84 = vmatpush1.xpose.msra.mxu0 %v54
    %85 = vmatprep.subr.mxu0 0.0
    %86 = vmatpush1.xpose.msra.mxu0 %v53
    %87 = vmatprep.subr.mxu0 0.0
    %88 = vmatpush1.xpose.msra.mxu0 %v52
    %89 = vmatprep.subr.mxu0 0.0
    %90 = vmatpush1.xpose.msra.mxu0 %v51
    %91 = vmatprep.subr.mxu0 0.0
    %92 = vmatpush1.xpose.msra.mxu0 %v50
    %93 = vmatprep.subr.mxu0 0.0
    %94 = vmatpush1.xpose.msra.mxu0 %v49
    %95 = vmatprep.subr.mxu0 0.0
    %96 = vmatpush1.xpose.msra.mxu0 %v48
    %97 = vmatprep.subr.mxu0 0.0
    %98 = vmatpush1.xpose.msra.mxu0 %v47
    %99 = vmatprep.subr.mxu0 0.0
    %100 = vmatpush1.xpose.msra.mxu0 %v46
    %101 = vmatprep.subr.mxu0 0.0
    %102 = vmatpush1.xpose.msra.mxu0 %v45
    %103 = vmatprep.subr.mxu0 0.0
    %104 = vmatpush1.xpose.msra.mxu0 %v44
    %105 = vmatprep.subr.mxu0 0.0
    %106 = vmatpush1.xpose.msra.mxu0 %v43
    %107 = vmatprep.subr.mxu0 0.0
    %108 = vmatpush2.xpose.msra.mxu0 0.0
    %109 = vmatprep.subr.mxu0 0.0
    %110 = vmatpush2.xpose.msra.mxu0 0.0
    %111 = vmatprep.subr.mxu0 0.0
    %112 = vmatpush2.xpose.msra.mxu0 0.0
    %113 = vmatprep.subr.mxu0 0.0
    %114 = vmatpush2.xpose.msra.mxu0 0.0
    %115 = vmatprep.subr.mxu0 0.0
    %116 = vmatpush2.xpose.msra.mxu0 0.0
    %117 = vmatprep.subr.mxu0 0.0
    %118 = vmatpush2.xpose.msra.mxu0 0.0
    %119 = vmatprep.subr.mxu0 0.0
    %120 = vmatpush2.xpose.msra.mxu0 0.0
    %121 = vmatprep.subr.mxu0 0.0
    %122 = vmatpush2.xpose.msra.mxu0 0.0
    %123 = vmatprep.subr.mxu0 0.0
    %124 = vmatpush2.xpose.msra.mxu0 0.0
    %125 = vmatprep.subr.mxu0 0.0
    %126 = vmatpush2.xpose.msra.mxu0 0.0
    %127 = vmatprep.subr.mxu0 0.0
    %128 = vmatpush2.xpose.msra.mxu0 0.0
    %129 = vmatprep.subr.mxu0 0.0
    %130 = vmatpush2.xpose.msra.mxu0 0.0
    %131 = vmatprep.subr.mxu0 0.0
    %132 = vmatpush2.xpose.msra.mxu0 0.0
    %133 = vmatprep.subr.mxu0 0.0
    %134 = vmatpush2.xpose.msra.mxu0 0.0
    %135 = vmatprep.subr.mxu0 0.0
    %136 = vmatpush2.xpose.msra.mxu0 0.0
    %137 = vmatprep.subr.mxu0 0.0
    %138 = vmatpush2.xpose.msra.mxu0 0.0
    %139 = vmatprep.mubr.f32.mxu0 0.0
    %140 = vmatmul.mubr.f32.gmra.mxu0 %v43
    %v141 = vpop.f32.mrf.mxu0
    %v142 = vadd.f32 0.0, %v141
    %v143 = vpop.f32.mrf.mxu0
    %144 = vmatprep.mubr.f32.mxu0 0.0
    %145 = vmatmul.mubr.f32.gmra.mxu0 %v44
    %v146 = vpop.f32.mrf.mxu0
    %v147 = vadd.f32 0.0, %v146
    %v148 = vpop.f32.mrf.mxu0
    %149 = vmatprep.mubr.f32.mxu0 0.0
    %150 = vmatmul.mubr.f32.gmra.mxu0 %v45
    %v151 = vpop.f32.mrf.mxu0
    %v152 = vadd.f32 0.0, %v151
    %v153 = vpop.f32.mrf.mxu0
    %154 = vmatprep.mubr.f32.mxu0 0.0
    %155 = vmatmul.mubr.f32.gmra.mxu0 %v46
    %v156 = vpop.f32.mrf.mxu0
    %v157 = vadd.f32 0.0, %v156
    %v158 = vpop.f32.mrf.mxu0
    %159 = vmatprep.mubr.f32.mxu0 0.0
    %160 = vmatmul.mubr.f32.gmra.mxu0 %v47
    %v161 = vpop.f32.mrf.mxu0
    %v162 = vadd.f32 0.0, %v161
    %v163 = vpop.f32.mrf.mxu0
    %164 = vmatprep.mubr.f32.mxu0 0.0
    %165 = vmatmul.mubr.f32.gmra.mxu0 %v48
    %v166 = vpop.f32.mrf.mxu0
    %v167 = vadd.f32 0.0, %v166
    %v168 = vpop.f32.mrf.mxu0
    %169 = vmatprep.mubr.f32.mxu0 0.0
    %170 = vmatmul.mubr.f32.gmra.mxu0 %v49
    %v171 = vpop.f32.mrf.mxu0
    %v172 = vadd.f32 0.0, %v171
    %v173 = vpop.f32.mrf.mxu0
    %174 = vmatprep.mubr.f32.mxu0 0.0
    %175 = vmatmul.mubr.f32.gmra.mxu0 %v50
    %v176 = vpop.f32.mrf.mxu0
    %v177 = vadd.f32 0.0, %v176
    %v178 = vpop.f32.mrf.mxu0
    %179 = vmatprep.mubr.f32.mxu0 0.0
    %180 = vmatmul.mubr.f32.gmra.mxu0 %v51
    %v181 = vpop.f32.mrf.mxu0
    %v182 = vadd.f32 0.0, %v181
    %v183 = vpop.f32.mrf.mxu0
    %184 = vmatprep.mubr.f32.mxu0 0.0
    %185 = vmatmul.mubr.f32.gmra.mxu0 %v52
    %v186 = vpop.f32.mrf.mxu0
    %v187 = vadd.f32 0.0, %v186
    %v188 = vpop.f32.mrf.mxu0
    %189 = vmatprep.mubr.f32.mxu0 0.0
    %190 = vmatmul.mubr.f32.gmra.mxu0 %v53
    %v191 = vpop.f32.mrf.mxu0
    %v192 = vadd.f32 0.0, %v191
    %v193 = vpop.f32.mrf.mxu0
    %194 = vmatprep.mubr.f32.mxu0 0.0
    %195 = vmatmul.mubr.f32.gmra.mxu0 %v54
    %v196 = vpop.f32.mrf.mxu0
    %v197 = vadd.f32 0.0, %v196
    %v198 = vpop.f32.mrf.mxu0
    %199 = vmatprep.mubr.f32.mxu0 0.0
    %200 = vmatmul.mubr.f32.gmra.mxu0 %v55
    %v201 = vpop.f32.mrf.mxu0
    %v202 = vadd.f32 0.0, %v201
    %v203 = vpop.f32.mrf.mxu0
    %204 = vmatprep.mubr.f32.mxu0 0.0
    %205 = vmatmul.mubr.f32.gmra.mxu0 %v56
    %v206 = vpop.f32.mrf.mxu0
    %v207 = vadd.f32 0.0, %v206
    %v208 = vpop.f32.mrf.mxu0
    %209 = vmatprep.mubr.f32.mxu0 0.0
    %210 = vmatmul.mubr.f32.gmra.mxu0 %v57
    %v211 = vpop.f32.mrf.mxu0
    %v212 = vadd.f32 0.0, %v211
    %v213 = vpop.f32.mrf.mxu0
    %214 = vmatprep.mubr.f32.mxu0 0.0
    %215 = vmatmul.mubr.f32.gmra.mxu0 %v58
    %v216 = vpop.f32.mrf.mxu0
    %v217 = vadd.f32 0.0, %v216
    %v218 = vpop.f32.mrf.mxu0
    %219 = vdwg.mxu0
    %v220 = vadd.f32 %v59, %v142
    %v221 = vadd.f32 %v60, %v147
    %v222 = vadd.f32 %v61, %v152
    %v223 = vadd.f32 %v62, %v157
    %v224 = vadd.f32 %v63, %v162
    %v225 = vadd.f32 %v64, %v167
    %v226 = vadd.f32 %v65, %v172
    %v227 = vadd.f32 %v66, %v177
    %v228 = vadd.f32 %v67, %v182
    %v229 = vadd.f32 %v68, %v187
    %v230 = vadd.f32 %v69, %v192
    %v231 = vadd.f32 %v70, %v197
    %v232 = vadd.f32 %v71, %v202
    %v233 = vadd.f32 %v72, %v207
    %v234 = vadd.f32 %v73, %v212
    %v235 = vadd.f32 %v74, %v217
    %236 = vst [vmem:[#allocation5] sm:$0xff] %v220
    %237 = vst [vmem:[#allocation5 + $0x8] sm:$0xff] %v221
    %238 = vst [vmem:[#allocation5 + $0x10] sm:$0xff] %v222
    %239 = vst [vmem:[#allocation5 + $0x18] sm:$0xff] %v223
    %240 = vst [vmem:[#allocation5 + $0x20] sm:$0xff] %v224
    %241 = vst [vmem:[#allocation5 + $0x28] sm:$0xff] %v225
    %242 = vst [vmem:[#allocation5 + $0x30] sm:$0xff] %v226
    %243 = vst [vmem:[#allocation5 + $0x38] sm:$0xff] %v227
    %244 = vst [vmem:[#allocation5 + $0x40] sm:$0xff] %v228
    %245 = vst [vmem:[#allocation5 + $0x48] sm:$0xff] %v229
    %246 = vst [vmem:[#allocation5 + $0x50] sm:$0xff] %v230
    %247 = vst [vmem:[#allocation5 + $0x58] sm:$0xff] %v231
    %248 = vst [vmem:[#allocation5 + $0x60] sm:$0xff] %v232
    %249 = vst [vmem:[#allocation5 + $0x68] sm:$0xff] %v233
    %250 = vst [vmem:[#allocation5 + $0x70] sm:$0xff] %v234
    %251 = vst [vmem:[#allocation5 + $0x78] sm:$0xff] %v235
    // Predicated region
    $region14: #{tpu_custom_call.1} parent=1 // pred_check
      %p252 = pneg %p23
    $region15: #{tpu_custom_call.1} parent=1 // pred_check_branch
      %254 = sbr.rel (%p252) target = $region17
    $region16: #{tpu_custom_call.1} parent=1 // pred_region
      %v255 = vld [vmem:[#allocation5] sm:$0xff]
      %v256 = vld [vmem:[#allocation5 + $0x8] sm:$0xff]
      %v257 = vld [vmem:[#allocation5 + $0x10] sm:$0xff]
      %v258 = vld [vmem:[#allocation5 + $0x18] sm:$0xff]
      %v259 = vld [vmem:[#allocation5 + $0x20] sm:$0xff]
      %v260 = vld [vmem:[#allocation5 + $0x28] sm:$0xff]
      %v261 = vld [vmem:[#allocation5 + $0x30] sm:$0xff]
      %v262 = vld [vmem:[#allocation5 + $0x38] sm:$0xff]
      %v263 = vld [vmem:[#allocation5 + $0x40] sm:$0xff]
      %v264 = vld [vmem:[#allocation5 + $0x48] sm:$0xff]
      %v265 = vld [vmem:[#allocation5 + $0x50] sm:$0xff]
      %v266 = vld [vmem:[#allocation5 + $0x58] sm:$0xff]
      %v267 = vld [vmem:[#allocation5 + $0x60] sm:$0xff]
      %v268 = vld [vmem:[#allocation5 + $0x68] sm:$0xff]
      %v269 = vld [vmem:[#allocation5 + $0x70] sm:$0xff]
      %v270 = vld [vmem:[#allocation5 + $0x78] sm:$0xff]
      %v271 = vmul.f32 %v255, 0.00012207031
      %v272 = vmul.f32 %v256, 0.00012207031
      %v273 = vmul.f32 %v257, 0.00012207031
      %v274 = vmul.f32 %v258, 0.00012207031
      %v275 = vmul.f32 %v259, 0.00012207031
      %v276 = vmul.f32 %v260, 0.00012207031
      %v277 = vmul.f32 %v261, 0.00012207031
      %v278 = vmul.f32 %v262, 0.00012207031
      %v279 = vmul.f32 %v263, 0.00012207031
      %v280 = vmul.f32 %v264, 0.00012207031
      %v281 = vmul.f32 %v265, 0.00012207031
      %v282 = vmul.f32 %v266, 0.00012207031
      %v283 = vmul.f32 %v267, 0.00012207031
      %v284 = vmul.f32 %v268, 0.00012207031
      %v285 = vmul.f32 %v269, 0.00012207031
      %v286 = vmul.f32 %v270, 0.00012207031
      %287 = vst [vmem:[#allocation5] sm:$0xff] %v271
      %288 = vst [vmem:[#allocation5 + $0x8] sm:$0xff] %v272
      %289 = vst [vmem:[#allocation5 + $0x10] sm:$0xff] %v273
      %290 = vst [vmem:[#allocation5 + $0x18] sm:$0xff] %v274
      %291 = vst [vmem:[#allocation5 + $0x20] sm:$0xff] %v275
      %292 = vst [vmem:[#allocation5 + $0x28] sm:$0xff] %v276
      %293 = vst [vmem:[#allocation5 + $0x30] sm:$0xff] %v277
      %294 = vst [vmem:[#allocation5 + $0x38] sm:$0xff] %v278
      %295 = vst [vmem:[#allocation5 + $0x40] sm:$0xff] %v279
      %296 = vst [vmem:[#allocation5 + $0x48] sm:$0xff] %v280
      %297 = vst [vmem:[#allocation5 + $0x50] sm:$0xff] %v281
      %298 = vst [vmem:[#allocation5 + $0x58] sm:$0xff] %v282
      %299 = vst [vmem:[#allocation5 + $0x60] sm:$0xff] %v283
      %300 = vst [vmem:[#allocation5 + $0x68] sm:$0xff] %v284
      %301 = vst [vmem:[#allocation5 + $0x70] sm:$0xff] %v285
      %302 = vst [vmem:[#allocation5 + $0x78] sm:$0xff] %v286
    $region17: #{tpu_custom_call.1} parent=1 // pred_fallthru
      _
    // Predicated region
    $region18: #{tpu_custom_call.1} parent=1 // pred_check
      _
    $region19: #{tpu_custom_call.1} parent=1 // pred_check_branch
      %304 = sbr.rel (0) target = $region21
    $region20: #{tpu_custom_call.1} parent=1 // pred_region
      %s306 = ssub.s32 2048, 2048
      %307 = vsyncadd [#allocation4], %s306
      %s308 = sshll.u32 [#allocation5], 4
      %s309 = int_to_ptr.vmem [resolvable:$true] %s308
      %314 = dma.vmem_to_hbm [thread:$0]  %s309, 2048, %s1, [#allocation4], 128, 128, 8
    $region21: #{tpu_custom_call.1} parent=1 // pred_fallthru
      _
    // Predicated region
    $region22: #{tpu_custom_call.1} parent=1 // pred_check
      _
    $region23: #{tpu_custom_call.1} parent=1 // pred_check_branch
      %316 = sbr.rel (0) target = $region25
    $region24: #{tpu_custom_call.1} parent=1 // pred_region
      %317 = dma.done [#allocation4], 2048
    $region25: #{tpu_custom_call.1} parent=1 // pred_fallthru
      _
    %318 = vsyncpa [#allocation3], 1
    %319 = vsyncpa [#allocation4], 1

</llo_original>
